<compile_context>
chip_gen: v7x
topology: tpu7x:2x2x1
jax: 0.10.0
libtpu: 0.0.40
codegen_flags: <defaults>
</compile_context>

<pallas_src>
import functools

import jax
import jax.numpy as jnp
from jax.experimental import pallas as pl
from jax.experimental.pallas import tpu as pltpu


def _crop_kernel(x_ref, o_ref, *, i, j, h, w):
    # x_ref: (1, H, W) plane in VMEM; o_ref: (1, h, w) crop.
    plane = x_ref[0]                            # (H, W)
    o_ref[0] = plane[i:i + h, j:j + w]          # static slice == F.crop(i, j, h, w)


def crop_index(sample, size, crop_index_i=0, crop_index_j=0,
               padding=None, fill=0, padding_mode="constant"):
    """Pallas implementation of CropIndex.forward (default-config path)."""
    h, w = (int(size), int(size)) if isinstance(size, int) else (int(size[0]), int(size[1]))
    i, j = int(crop_index_i), int(crop_index_j)

    trans, img = sample["trans"], sample["image"]     # img: (N, C, H, W)

    if padding is not None:
        # TODO(synk): only constant-mode padding is implemented here (plain-JAX
        # glue); 'reflect'/'edge'/'symmetric' modes and pad_if_needed are not.
        if isinstance(padding, int):
            pl_, pt, pr, pb = padding, padding, padding, padding
        elif len(padding) == 2:
            pl_, pt, pr, pb = padding[0], padding[1], padding[0], padding[1]
        else:
            pl_, pt, pr, pb = padding
        img = jnp.pad(img, ((0, 0), (0, 0), (pt, pb), (pl_, pr)),
                      mode="constant", constant_values=fill)

    N, C, H, W = img.shape
    B = N * C
    x3d = img.reshape(B, H, W)

    kernel = functools.partial(_crop_kernel, i=i, j=j, h=h, w=w)
    itemsize = jnp.dtype(img.dtype).itemsize
    out3d = pl.pallas_call(
        kernel,
        out_shape=jax.ShapeDtypeStruct((B, h, w), img.dtype),
        grid=(B,),
        # Last two dims equal the full array dims -> satisfies the (8, 128)
        # block constraint for arbitrary H/W and arbitrary crop sizes.
        in_specs=[pl.BlockSpec((1, H, W), lambda b: (b, 0, 0))],
        out_specs=pl.BlockSpec((1, h, w), lambda b: (b, 0, 0)),
        compiler_params=pltpu.CompilerParams(
            dimension_semantics=("parallel",)),
        cost_estimate=pl.CostEstimate(
            flops=0, transcendentals=0,
            bytes_accessed=(B * H * W + B * h * w) * itemsize),
    )(x3d)

    trans_arr = jnp.asarray(trans)
    trans_out = jnp.concatenate(
        [trans_arr, jnp.array([i, j], dtype=trans_arr.dtype)], axis=0)
    return {"trans": trans_out, "image": out3d.reshape(N, C, h, w)}


if __name__ == "__main__":
    key = jax.random.PRNGKey(0)
    img = jax.random.normal(key, (2, 4, 16, 16), dtype=jnp.float32)
    sample = {"trans": jnp.array([1], dtype=jnp.int32), "image": img}

    size = (8, 8)
    ci, cj = 2, 3
    out = crop_index(sample, size, crop_index_i=ci, crop_index_j=cj)
    jax.block_until_ready(out["image"])

    # Pure-JAX reference.
    expected_img = img[:, :, ci:ci + size[0], cj:cj + size[1]]
    expected_trans = jnp.array([1, ci, cj], dtype=jnp.int32)
    assert out["image"].shape == (2, 4, 8, 8)
    assert jnp.allclose(out["image"], expected_img), "image mismatch vs reference"
    assert jnp.array_equal(out["trans"], expected_trans), "trans mismatch vs reference"
    print("KERNEL_OK")
</pallas_src>

<mosaic_0001>
module attributes {stable_mosaic.version = 11 : i64} {
  func.func @_crop_kernel(%arg0: i32, %arg1: memref<1x16x16xf32, #tpu.memory_space<vmem>>, %arg2: memref<1x8x8xf32, #tpu.memory_space<vmem>>) attributes {dimension_semantics = [#tpu.dimension_semantics<parallel>], iteration_bounds = array<i64: 8>, scalar_prefetch = 0 : i64, scratch_operands = 0 : i64, tpu.core_type = #tpu.core_type<tc>, window_params = [{transform_indices = @transform_0, window_bounds = array<i64: 1, 16, 16>}, {transform_indices = @transform_1, window_bounds = array<i64: 1, 8, 8>}]} {
    %c0 = arith.constant 0 : index
    %c0_0 = arith.constant 0 : index
    %c0_1 = arith.constant 0 : index
    %0 = vector.load %arg1[%c0, %c0_0, %c0_1] : memref<1x16x16xf32, #tpu.memory_space<vmem>>, vector<1x16x16xf32>
    %1 = vector.shape_cast %0 : vector<1x16x16xf32> to vector<16x16xf32>
    %2 = vector.extract_strided_slice %1 {offsets = [2, 3], sizes = [8, 8], strides = [1, 1]} : vector<16x16xf32> to vector<8x8xf32>
    %c0_2 = arith.constant 0 : index
    %c0_3 = arith.constant 0 : index
    %c0_4 = arith.constant 0 : index
    %3 = vector.load %arg2[%c0_2, %c0_3, %c0_4] : memref<1x8x8xf32, #tpu.memory_space<vmem>>, vector<1x8x8xf32>
    %4 = vector.shape_cast %3 : vector<1x8x8xf32> to vector<8x8xf32>
    %5 = vector.shape_cast %2 : vector<8x8xf32> to vector<1x8x8xf32>
    tpu.vector_store %arg2[%c0_2, %c0_3, %c0_4], %5 {strides = array<i32>} : memref<1x8x8xf32, #tpu.memory_space<vmem>>, vector<1x8x8xf32>,
    return
  }
  func.func @transform_0(%arg0: i32) -> (i32, i32, i32) {
    %c0_i32 = arith.constant 0 : i32
    %c0_i32_0 = arith.constant 0 : i32
    %c0_i32_1 = arith.constant 0 : i32
    return %arg0, %c0_i32, %c0_i32_0 : i32, i32, i32
  }
  func.func @transform_1(%arg0: i32) -> (i32, i32, i32) {
    %c0_i32 = arith.constant 0 : i32
    %c0_i32_0 = arith.constant 0 : i32
    %c0_i32_1 = arith.constant 0 : i32
    return %arg0, %c0_i32, %c0_i32_0 : i32, i32, i32
  }
}

</mosaic_0001>

<llo_original>
// kernel: tpu_custom_call.1
$region0: #{tpu_custom_call.1}
  #allocation0 [shape = 'u32[]', space=smem, size = 0x4, offset = 0x4, fixed_abs, tag = 'smem constant byte address 0x4 - core index']
  #allocation1 [shape = 'u32[144,128]{1,0:T(1,128)}', space=vmem, size = 0x12000, scoped, tag = 'internal scratch']
  %s0 = inlined_call_operand.hbm [shape: f32[8,16,16], index: 0, kind: input, shape index: {}]
  %s1 = inlined_call_operand.hbm [shape: f32[8,8,8], index: 1, kind: output, shape index: {}]
  %s2 = sld [smem:[#allocation0]]
  $region41: #{tpu_custom_call.1} parent=0
    _
  %s4 = ssub.s32 1, %s2
  %s5 = scalar_select 0, %s4, %s2
  $region1: #{tpu_custom_call.1} parent=0
    #allocation2 [shape = 'u8[16384]{0}', space=vmem, size = 0x4000, scoped, tag = 'input window, operand 0']
    #allocation3 [shape = 's32[2]{0}', space=sflag, size = 0x8, scoped, tag = 'scoped memory for tpu_custom_call.1']
    #allocation4 [shape = 's32[2]{0}', space=sflag, size = 0x8, scoped, tag = 'scoped memory for tpu_custom_call.1']
    #allocation5 [shape = 'u8[8192]{0}', space=vmem, size = 0x2000, scoped, tag = 'output window, operand 0']
    %6 = vsyncpa [#allocation3], 0
    %s7 = scalar_lea.sflag [#allocation3], 1
    %8 = vsyncpa %s7, 0
    %9 = vsyncpa [#allocation4], 0
    %s10 = scalar_lea.sflag [#allocation4], 1
    %11 = vsyncpa %s10, 0
    loop: start=0, step=1, limit=10
    $region2: #{tpu_custom_call.1} parent=1 // loop_pre_header
      _
    $region3: #{tpu_custom_call.1} parent=1 // loop_header
      %s13 = sphi 0, %s17
      %p14 = scmp.ge.s32.totalorder %s13, 10
      %s23 = sphi 0, %s25
      %s26 = sphi 0, %s23
      %s27 = sphi 0, %s26
      %s43 = sphi 0, %s27
      %s49 = sphi 0, %s51
      %s52 = sphi 0, %s49
      %s53 = sphi 0, %s52
      %s69 = sphi 0, %s53
    $region4: #{tpu_custom_call.1} parent=1 // loop_header_branch
      %16 = sbr.rel (%p14) target = $region8
    $region5: #{tpu_custom_call.1} parent=1 // loop_body
      %s18 = ssub.s32 %s13, 1
      %s19 = ssub.s32 %s13, 2
      %s20 = sadd.s32 %s13, 1
      %s21 = ssub.s32 %s13, %s20
      %p22 = scmp.eq.s32.totalorder %s21, 0
      %s24 = sadd.s32 %s23, 1
      %s25 = scalar_select %p22, %s23, %s24
      %p28 = pneg %p22
      %p29 = scmp.eq.s32.totalorder %s13, 7
      %p30 = por %p28, %p29
      %p31 = scmp.ne.s32.totalorder %s23, %s26
      %p32 = scmp.eq.s32.totalorder %s13, 0
      %p33 = por %p31, %p32
      %p34 = scmp.ne.s32.totalorder %s23, %s26
      %p35 = scmp.eq.s32.totalorder %s18, 7
      %p36 = por %p34, %p35
      %p37 = scmp.ne.s32.totalorder %s26, %s27
      %p38 = scmp.eq.s32.totalorder %s18, 0
      %p39 = por %p37, %p38
      %p40 = scmp.ne.s32.totalorder %s26, %s27
      %p41 = scmp.eq.s32.totalorder %s19, 7
      %p42 = por %p40, %p41
      %p44 = scmp.ne.s32.totalorder %s27, %s43
      %p45 = scmp.eq.s32.totalorder %s19, 0
      %p46 = por %p44, %p45
      %s47 = ssub.s32 %s13, %s20
      %p48 = scmp.eq.s32.totalorder %s47, 0
      %s50 = sadd.s32 %s49, 1
      %s51 = scalar_select %p48, %s49, %s50
      %p54 = pneg %p48
      %p55 = scmp.eq.s32.totalorder %s13, 7
      %p56 = por %p54, %p55
      %p57 = scmp.ne.s32.totalorder %s49, %s52
      %p58 = scmp.eq.s32.totalorder %s13, 0
      %p59 = por %p57, %p58
      %p60 = scmp.ne.s32.totalorder %s49, %s52
      %p61 = scmp.eq.s32.totalorder %s18, 7
      %p62 = por %p60, %p61
      %p63 = scmp.ne.s32.totalorder %s52, %s53
      %p64 = scmp.eq.s32.totalorder %s18, 0
      %p65 = por %p63, %p64
      %p66 = scmp.ne.s32.totalorder %s52, %s53
      %p67 = scmp.eq.s32.totalorder %s19, 7
      %p68 = por %p66, %p67
      %p70 = scmp.ne.s32.totalorder %s53, %s69
      %p71 = scmp.eq.s32.totalorder %s19, 0
      %p72 = por %p70, %p71
      %p73 = scmp.le.s32.totalorder 1, %s13
      %p74 = scmp.lt.s32.totalorder %s13, 9
      %p75 = pnand %p73, %p74
      %p76 = pneg %p75
      // Predicated region
      $region9: #{tpu_custom_call.1} parent=5 // pred_check
        _
      $region10: #{tpu_custom_call.1} parent=5 // pred_check_branch
        %78 = sbr.rel (%p75) target = $region12
      $region11: #{tpu_custom_call.1} parent=5 // pred_region
        %s79 = ssub.s32 %s13, 1
      $region12: #{tpu_custom_call.1} parent=5 // pred_fallthru
        _
      %p80 = scmp.lt.s32.totalorder %s13, 8
      // Predicated region
      $region13: #{tpu_custom_call.1} parent=5 // pred_check
        %p81 = pneg %p80
      $region14: #{tpu_custom_call.1} parent=5 // pred_check_branch
        %83 = sbr.rel (%p81) target = $region16
      $region15: #{tpu_custom_call.1} parent=5 // pred_region
        // Predicated region
        $region17: #{tpu_custom_call.1} parent=15 // pred_check
          %p84 = pneg %p33
        $region18: #{tpu_custom_call.1} parent=15 // pred_check_branch
          %86 = sbr.rel (%p84) target = $region20
        $region19: #{tpu_custom_call.1} parent=15 // pred_region
          %s87 = sand.u32 %s23, 1
          %s88 = scalar_lea.sflag [#allocation3], %s87
          %s89 = sand.u32 %s23, 1
          %s90 = smul.addr %s89, 16
          %s91 = scalar_lea.vmem [#allocation2], %s90
          %s93 = ssub.s32 256, 256
          %94 = vsyncadd %s88, %s93
          %s95 = smul.addr %s13, 2
          %s96 = smul.addr %s95, 128
          %s97 = scalar_lea.hbm %s0, %s96
          %s98 = sshll.u32 %s91, 4
          %s99 = int_to_ptr.vmem [resolvable:$true] %s98
          %104 = dma.hbm_to_vmem [thread:$0]  %s97, 256, %s99, %s88, 128, 128, 8
        $region20: #{tpu_custom_call.1} parent=15 // pred_fallthru
          _
      $region16: #{tpu_custom_call.1} parent=5 // pred_fallthru
        _
      %p105 = scmp.le.s32.totalorder 1, %s13
      %p106 = scmp.lt.s32.totalorder %s13, 9
      %p107 = pnand %p105, %p106
      %p108 = pneg %p107
      // Predicated region
      $region21: #{tpu_custom_call.1} parent=5 // pred_check
        _
      $region22: #{tpu_custom_call.1} parent=5 // pred_check_branch
        %110 = sbr.rel (%p107) target = $region24
      $region23: #{tpu_custom_call.1} parent=5 // pred_region
        %s111 = ssub.s32 %s13, 1
        %s112 = sand.u32 %s26, 1
        %s113 = scalar_lea.sflag [#allocation3], %s112
        %s114 = sand.u32 %s26, 1
        %s115 = smul.addr %s114, 16
        %s116 = scalar_lea.vmem [#allocation2], %s115
        // Predicated region
        $region25: #{tpu_custom_call.1} parent=23 // pred_check
          %p117 = pneg %p39
        $region26: #{tpu_custom_call.1} parent=23 // pred_check_branch
          %119 = sbr.rel (%p117) target = $region28
        $region27: #{tpu_custom_call.1} parent=23 // pred_region
          %120 = dma.done %s113, 256
        $region28: #{tpu_custom_call.1} parent=23 // pred_fallthru
          _
        %s121 = sand.u32 %s26, 1
        %s122 = scalar_lea.sflag [#allocation3], %s121
        %s123 = sand.u32 %s26, 1
        %s124 = smul.addr %s123, 16
        %s125 = scalar_lea.vmem [#allocation2], %s124
        %p126 = pneg %p39
        %p127 = pneg %p36
        %p128 = pneg %p65
        %p129 = pneg %p62
        %s130 = sand.u32 %s52, 1
        %s131 = scalar_lea.sflag [#allocation4], %s130
        %s132 = sand.u32 %s52, 1
        %s133 = smul.addr %s132, 8
        %s134 = scalar_lea.vmem [#allocation5], %s133
        %v135 = vld [vmem:[%s116] sm:$0xff]
        %v136 = vld [vmem:[%s116 + $0x8] sm:$0xff]
        %139 = vrot.lane.b32.xlu0 %v135, 125
        %v140 = vpop.permute.xlu0 %139
        %141 = vrot.lane.b32.xlu0 %v136, 125
        %v142 = vpop.permute.xlu0 %141
        %vm145 = vcmask 64514
        %146 = vst.msk [vmem:[%s134 - $0x2] sm:$0xfc] %vm145, %v140
        %vm147 = vcmask 58368
        %148 = vst.msk [vmem:[%s134 + $0x6] sm:$0x3] %vm147, %v142
        %s149 = sand.u32 %s52, 1
        %s150 = scalar_lea.sflag [#allocation4], %s149
        %s151 = sand.u32 %s52, 1
        %s152 = smul.addr %s151, 8
        %s153 = scalar_lea.vmem [#allocation5], %s152
        // Predicated region
        $region29: #{tpu_custom_call.1} parent=23 // pred_check
          %p154 = pneg %p62
        $region30: #{tpu_custom_call.1} parent=23 // pred_check_branch
          %156 = sbr.rel (%p154) target = $region32
        $region31: #{tpu_custom_call.1} parent=23 // pred_region
          %s158 = ssub.s32 128, 128
          %159 = vsyncadd %s150, %s158
          %s160 = smul.addr %s18, 128
          %s161 = scalar_lea.hbm %s1, %s160
          %s163 = sshll.u32 %s153, 4
          %s164 = int_to_ptr.vmem [resolvable:$true] %s163
          %166 = dma.vmem_to_hbm [thread:$0]  %s164, 128, %s161, %s150
        $region32: #{tpu_custom_call.1} parent=23 // pred_fallthru
          _
      $region24: #{tpu_custom_call.1} parent=5 // pred_fallthru
        _
      %p167 = scmp.le.s32.totalorder 2, %s13
      // Predicated region
      $region33: #{tpu_custom_call.1} parent=5 // pred_check
        %p168 = pneg %p167
      $region34: #{tpu_custom_call.1} parent=5 // pred_check_branch
        %170 = sbr.rel (%p168) target = $region36
      $region35: #{tpu_custom_call.1} parent=5 // pred_region
        %s171 = ssub.s32 %s13, 2
        // Predicated region
        $region37: #{tpu_custom_call.1} parent=35 // pred_check
          %p172 = pneg %p68
        $region38: #{tpu_custom_call.1} parent=35 // pred_check_branch
          %174 = sbr.rel (%p172) target = $region40
        $region39: #{tpu_custom_call.1} parent=35 // pred_region
          %s175 = sand.u32 %s53, 1
          %s176 = scalar_lea.sflag [#allocation4], %s175
          %s177 = sand.u32 %s53, 1
          %s178 = smul.addr %s177, 8
          %s179 = scalar_lea.vmem [#allocation5], %s178
          %180 = dma.done %s176, 128
        $region40: #{tpu_custom_call.1} parent=35 // pred_fallthru
          _
      $region36: #{tpu_custom_call.1} parent=5 // pred_fallthru
        _
    $region6: #{tpu_custom_call.1} parent=1 // loop_footer
      %s17 = sadd.s32 1, %s13
    $region7: #{tpu_custom_call.1} parent=1 // loop_footer_branch
      %12 = sbr.rel target = $region3
    $region8: #{tpu_custom_call.1} parent=1 // loop_exit
      _
    %181 = vsyncpa [#allocation3], 1
    %s182 = scalar_lea.sflag [#allocation3], 1
    %183 = vsyncpa %s182, 1
    %184 = vsyncpa [#allocation4], 1
    %s185 = scalar_lea.sflag [#allocation4], 1
    %186 = vsyncpa %s185, 1

</llo_original>
